<compile_context>
chip_gen: v6e
topology: v6e:2x2x1
jax: 0.10.0
libtpu: 0.0.40
codegen_flags: <defaults>
</compile_context>

<pallas_src>
import functools

import jax
import jax.numpy as jnp
from jax.experimental import pallas as pl
from jax.experimental.pallas import tpu as pltpu

_LANE = 128
_SUBLANE = 8


def _round_up(x, m):
    return ((x + m - 1) // m) * m


def _gather_vmem_kernel(idx_ref, preds_ref, out_ref, *, tm):
    """Fast path: preds fully resident in VMEM (constant block, fetched once).

    Each grid step copies TM rows: SMEM scalar index -> dynamic-sublane VMEM
    read -> static store into the (TM, D) output block.
    """
    base = pl.program_id(0) * tm
    for r in range(tm):
        row = idx_ref[base + r]
        out_ref[pl.ds(r, 1), :] = preds_ref[pl.ds(row, 1), :]


def _gather_dma_kernel(idx_ref, preds_hbm, out_ref, sem, *, tm, nsem):
    """Slow path: preds stays in HBM.

    Each grid step issues TM single-row DMAs directly into the pipelined
    (TM, D) output block, keeping a rolling window of `nsem` copies in flight.
    """
    base = pl.program_id(0) * tm
    copies = [None] * tm
    for r in range(tm):
        row = idx_ref[base + r]
        if r >= nsem:
            copies[r - nsem].wait()  # free this semaphore slot before reuse
        cp = pltpu.make_async_copy(
            preds_hbm.at[pl.ds(row, 1)],
            out_ref.at[pl.ds(r, 1)],
            sem.at[r % nsem],
        )
        cp.start()
        copies[r] = cp
    for r in range(max(0, tm - nsem), tm):
        copies[r].wait()


def identity_select(preds, idx, *, force_dma=False):
    """Pallas TPU implementation of `preds[idx]` (gather rows along axis 0)."""
    preds = jnp.asarray(preds)
    idx = jnp.asarray(idx)
    assert idx.ndim == 1, "idx must be a 1-D vector of row indices"

    orig_shape = preds.shape
    out_trailing = orig_shape[1:]
    if preds.ndim == 1:
        preds2d = preds[:, None]
    else:
        preds2d = preds.reshape(orig_shape[0], -1)

    N, D = preds2d.shape
    M = idx.shape[0]
    dtype = preds2d.dtype
    itemsize = jnp.dtype(dtype).itemsize

    if M == 0 or N == 0:
        return jnp.zeros((M,) + out_trailing, dtype=dtype)

    # Clamp untrusted indices so they can never drive an OOB read / DMA.
    idx = jnp.clip(idx.astype(jnp.int32), 0, N - 1)

    # Minimum sublane tile for this element width (8 f32 / 16 bf16 / 32 int8).
    sub = _SUBLANE * max(1, 4 // max(itemsize, 1))

    # Per-generation VMEM capacity (v5e/v6e: 128 MiB, v7x: 64 MiB per TC).
    try:
        vmem_budget = int(pltpu.get_tpu_info().vmem_capacity_bytes)
    except Exception:
        vmem_budget = 64 * 1024 * 1024  # conservative default (v7x per-TC)

    # VMEM footprint of preds if kept resident (layout pads to (sub, 128) tiles).
    preds_vmem_bytes = _round_up(N, sub) * _round_up(D, _LANE) * itemsize
    use_vmem_resident = (not force_dma) and (
        2 * preds_vmem_bytes + (8 << 20) <= int(vmem_budget * 0.8)
    )

    # Rows gathered per grid step: large enough to amortize the ~600-cycle
    # per-step overhead, small enough that the double-buffered output block
    # stays a few MiB (and the unrolled kernel body stays compact).
    row_vmem_bytes = _round_up(D, _LANE) * itemsize
    cap = 128 if use_vmem_resident else 64
    tm_by_bytes = max(sub, ((4 << 20) // max(row_vmem_bytes, 1)) // sub * sub)
    TM = min(cap, tm_by_bytes, _round_up(M, sub))
    TM = max(sub, (TM // sub) * sub)

    Mp = _round_up(M, TM)
    if Mp != M:
        # Pad rows gather row 0 (valid after clamp) and are sliced off below.
        idx = jnp.pad(idx, (0, Mp - M))
    grid = (Mp // TM,)

    out_block_bytes = TM * row_vmem_bytes

    if use_vmem_resident:
        needed = 2 * preds_vmem_bytes + 4 * out_block_bytes + (2 << 20)
        vmem_limit = int(min(max(needed, 16 << 20), int(vmem_budget * 0.9)))
        out = pl.pallas_call(
            functools.partial(_gather_vmem_kernel, tm=TM),
            out_shape=jax.ShapeDtypeStruct((Mp, D), dtype),
            grid_spec=pltpu.PrefetchScalarGridSpec(
                num_scalar_prefetch=1,  # idx lives in SMEM
                grid=grid,
                in_specs=[
                    # preds resident in VMEM for the whole grid (constant block
                    # index -> fetched once, revisited every step).
                    pl.BlockSpec((N, D), lambda i, idx_ref: (0, 0)),
                ],
                out_specs=pl.BlockSpec((TM, D), lambda i, idx_ref: (i, 0)),
            ),
            compiler_params=pltpu.CompilerParams(
                dimension_semantics=("parallel",),
                vmem_limit_bytes=vmem_limit,
            ),
        )(idx, preds2d)
    else:
        nsem = min(8, TM)
        needed = 4 * out_block_bytes + (4 << 20)
        vmem_limit = int(min(max(needed, 16 << 20), int(vmem_budget * 0.9)))
        out = pl.pallas_call(
            functools.partial(_gather_dma_kernel, tm=TM, nsem=nsem),
            out_shape=jax.ShapeDtypeStruct((Mp, D), dtype),
            grid_spec=pltpu.PrefetchScalarGridSpec(
                num_scalar_prefetch=1,
                grid=grid,
                in_specs=[pl.BlockSpec(memory_space=pl.ANY)],  # preds stays in HBM
                out_specs=pl.BlockSpec((TM, D), lambda i, idx_ref: (i, 0)),
                scratch_shapes=[pltpu.SemaphoreType.DMA((nsem,))],
            ),
            compiler_params=pltpu.CompilerParams(
                dimension_semantics=("parallel",),
                vmem_limit_bytes=vmem_limit,
            ),
        )(idx, preds2d)

    out = out[:M]
    return out.reshape((M,) + out_trailing)


if __name__ == "__main__":
    key = jax.random.PRNGKey(0)
    k_preds, k_idx = jax.random.split(key)

    N, D, M = 32, 128, 20  # M not a multiple of TM -> exercises tail padding
    preds = jax.random.normal(k_preds, (N, D), dtype=jnp.float32)
    idx = jax.random.randint(k_idx, (M,), 0, N, dtype=jnp.int32)
    ref = preds[idx]

    # Fast path (VMEM-resident preds).
    out_fast = jax.block_until_ready(identity_select(preds, idx))
    assert out_fast.shape == (M, D)
    assert jnp.array_equal(out_fast, ref)

    # Slow path (per-row DMA gather straight into the output block), forced.
    out_dma = jax.block_until_ready(identity_select(preds, idx, force_dma=True))
    assert jnp.array_equal(out_dma, ref)

    # 1-D preds (the common i_deepis case: per-node scalar predictions).
    preds1d = jax.random.normal(k_preds, (N,), dtype=jnp.float32)
    out1d = jax.block_until_ready(identity_select(preds1d, idx))
    assert out1d.shape == (M,)
    assert jnp.array_equal(out1d, preds1d[idx])

    # Non-multiple-of-128 feature dim (full-dim blocks, no wrapper padding).
    preds_odd = jax.random.normal(k_preds, (N, 20), dtype=jnp.float32)
    out_odd = jax.block_until_ready(identity_select(preds_odd, idx))
    assert jnp.array_equal(out_odd, preds_odd[idx])

    print("KERNEL_OK")
</pallas_src>

<mosaic_0001>
module attributes {stable_mosaic.version = 11 : i64} {
  func.func @_gather_vmem_kernel(%arg0: i32, %arg1: memref<24xi32, #tpu.memory_space<smem>>, %arg2: memref<32x128xf32, #tpu.memory_space<vmem>>, %arg3: memref<24x128xf32, #tpu.memory_space<vmem>>) attributes {dimension_semantics = [#tpu.dimension_semantics<parallel>], iteration_bounds = array<i64: 1>, scalar_prefetch = 1 : i64, scratch_operands = 0 : i64, tpu.core_type = #tpu.core_type<tc>, window_params = [{pipeline_mode = #tpu.pipeline_mode<synchronous>, transform_indices = @transform_0, window_bounds = array<i64: 32, 128>}, {transform_indices = @transform_1, window_bounds = array<i64: 24, 128>}]} {
    %c24_i32 = arith.constant 24 : i32
    %0 = arith.muli %arg0, %c24_i32 : i32
    %c0_i32 = arith.constant 0 : i32
    %1 = arith.addi %0, %c0_i32 : i32
    %2 = arith.index_cast %1 : i32 to index
    %3 = memref.load %arg1[%2] : memref<24xi32, #tpu.memory_space<smem>>
    %4 = arith.index_cast %3 : i32 to index
    %c0 = arith.constant 0 : index
    %5 = vector.load %arg2[%4, %c0] : memref<32x128xf32, #tpu.memory_space<vmem>>, vector<1x128xf32>
    %c0_0 = arith.constant 0 : index
    %c0_1 = arith.constant 0 : index
    %6 = vector.load %arg3[%c0_0, %c0_1] : memref<24x128xf32, #tpu.memory_space<vmem>>, vector<1x128xf32>
    tpu.vector_store %arg3[%c0_0, %c0_1], %5 {strides = array<i32>} : memref<24x128xf32, #tpu.memory_space<vmem>>, vector<1x128xf32>,
    %c1_i32 = arith.constant 1 : i32
    %7 = arith.addi %0, %c1_i32 : i32
    %8 = arith.index_cast %7 : i32 to index
    %9 = memref.load %arg1[%8] : memref<24xi32, #tpu.memory_space<smem>>
    %10 = arith.index_cast %9 : i32 to index
    %c0_2 = arith.constant 0 : index
    %11 = vector.load %arg2[%10, %c0_2] : memref<32x128xf32, #tpu.memory_space<vmem>>, vector<1x128xf32>
    %c1 = arith.constant 1 : index
    %c0_3 = arith.constant 0 : index
    %12 = vector.load %arg3[%c1, %c0_3] : memref<24x128xf32, #tpu.memory_space<vmem>>, vector<1x128xf32>
    tpu.vector_store %arg3[%c1, %c0_3], %11 {strides = array<i32>} : memref<24x128xf32, #tpu.memory_space<vmem>>, vector<1x128xf32>,
    %c2_i32 = arith.constant 2 : i32
    %13 = arith.addi %0, %c2_i32 : i32
    %14 = arith.index_cast %13 : i32 to index
    %15 = memref.load %arg1[%14] : memref<24xi32, #tpu.memory_space<smem>>
    %16 = arith.index_cast %15 : i32 to index
    %c0_4 = arith.constant 0 : index
    %17 = vector.load %arg2[%16, %c0_4] : memref<32x128xf32, #tpu.memory_space<vmem>>, vector<1x128xf32>
    %c2 = arith.constant 2 : index
    %c0_5 = arith.constant 0 : index
    %18 = vector.load %arg3[%c2, %c0_5] : memref<24x128xf32, #tpu.memory_space<vmem>>, vector<1x128xf32>
    tpu.vector_store %arg3[%c2, %c0_5], %17 {strides = array<i32>} : memref<24x128xf32, #tpu.memory_space<vmem>>, vector<1x128xf32>,
    %c3_i32 = arith.constant 3 : i32
    %19 = arith.addi %0, %c3_i32 : i32
    %20 = arith.index_cast %19 : i32 to index
    %21 = memref.load %arg1[%20] : memref<24xi32, #tpu.memory_space<smem>>
    %22 = arith.index_cast %21 : i32 to index
    %c0_6 = arith.constant 0 : index
    %23 = vector.load %arg2[%22, %c0_6] : memref<32x128xf32, #tpu.memory_space<vmem>>, vector<1x128xf32>
    %c3 = arith.constant 3 : index
    %c0_7 = arith.constant 0 : index
    %24 = vector.load %arg3[%c3, %c0_7] : memref<24x128xf32, #tpu.memory_space<vmem>>, vector<1x128xf32>
    tpu.vector_store %arg3[%c3, %c0_7], %23 {strides = array<i32>} : memref<24x128xf32, #tpu.memory_space<vmem>>, vector<1x128xf32>,
    %c4_i32 = arith.constant 4 : i32
    %25 = arith.addi %0, %c4_i32 : i32
    %26 = arith.index_cast %25 : i32 to index
    %27 = memref.load %arg1[%26] : memref<24xi32, #tpu.memory_space<smem>>
    %28 = arith.index_cast %27 : i32 to index
    %c0_8 = arith.constant 0 : index
    %29 = vector.load %arg2[%28, %c0_8] : memref<32x128xf32, #tpu.memory_space<vmem>>, vector<1x128xf32>
    %c4 = arith.constant 4 : index
    %c0_9 = arith.constant 0 : index
    %30 = vector.load %arg3[%c4, %c0_9] : memref<24x128xf32, #tpu.memory_space<vmem>>, vector<1x128xf32>
    tpu.vector_store %arg3[%c4, %c0_9], %29 {strides = array<i32>} : memref<24x128xf32, #tpu.memory_space<vmem>>, vector<1x128xf32>,
    %c5_i32 = arith.constant 5 : i32
    %31 = arith.addi %0, %c5_i32 : i32
    %32 = arith.index_cast %31 : i32 to index
    %33 = memref.load %arg1[%32] : memref<24xi32, #tpu.memory_space<smem>>
    %34 = arith.index_cast %33 : i32 to index
    %c0_10 = arith.constant 0 : index
    %35 = vector.load %arg2[%34, %c0_10] : memref<32x128xf32, #tpu.memory_space<vmem>>, vector<1x128xf32>
    %c5 = arith.constant 5 : index
    %c0_11 = arith.constant 0 : index
    %36 = vector.load %arg3[%c5, %c0_11] : memref<24x128xf32, #tpu.memory_space<vmem>>, vector<1x128xf32>
    tpu.vector_store %arg3[%c5, %c0_11], %35 {strides = array<i32>} : memref<24x128xf32, #tpu.memory_space<vmem>>, vector<1x128xf32>,
    %c6_i32 = arith.constant 6 : i32
    %37 = arith.addi %0, %c6_i32 : i32
    %38 = arith.index_cast %37 : i32 to index
    %39 = memref.load %arg1[%38] : memref<24xi32, #tpu.memory_space<smem>>
    %40 = arith.index_cast %39 : i32 to index
    %c0_12 = arith.constant 0 : index
    %41 = vector.load %arg2[%40, %c0_12] : memref<32x128xf32, #tpu.memory_space<vmem>>, vector<1x128xf32>
    %c6 = arith.constant 6 : index
    %c0_13 = arith.constant 0 : index
    %42 = vector.load %arg3[%c6, %c0_13] : memref<24x128xf32, #tpu.memory_space<vmem>>, vector<1x128xf32>
    tpu.vector_store %arg3[%c6, %c0_13], %41 {strides = array<i32>} : memref<24x128xf32, #tpu.memory_space<vmem>>, vector<1x128xf32>,
    %c7_i32 = arith.constant 7 : i32
    %43 = arith.addi %0, %c7_i32 : i32
    %44 = arith.index_cast %43 : i32 to index
    %45 = memref.load %arg1[%44] : memref<24xi32, #tpu.memory_space<smem>>
    %46 = arith.index_cast %45 : i32 to index
    %c0_14 = arith.constant 0 : index
    %47 = vector.load %arg2[%46, %c0_14] : memref<32x128xf32, #tpu.memory_space<vmem>>, vector<1x128xf32>
    %c7 = arith.constant 7 : index
    %c0_15 = arith.constant 0 : index
    %48 = vector.load %arg3[%c7, %c0_15] : memref<24x128xf32, #tpu.memory_space<vmem>>, vector<1x128xf32>
    tpu.vector_store %arg3[%c7, %c0_15], %47 {strides = array<i32>} : memref<24x128xf32, #tpu.memory_space<vmem>>, vector<1x128xf32>,
    %c8_i32 = arith.constant 8 : i32
    %49 = arith.addi %0, %c8_i32 : i32
    %50 = arith.index_cast %49 : i32 to index
    %51 = memref.load %arg1[%50] : memref<24xi32, #tpu.memory_space<smem>>
    %52 = arith.index_cast %51 : i32 to index
    %c0_16 = arith.constant 0 : index
    %53 = vector.load %arg2[%52, %c0_16] : memref<32x128xf32, #tpu.memory_space<vmem>>, vector<1x128xf32>
    %c8 = arith.constant 8 : index
    %c0_17 = arith.constant 0 : index
    %54 = vector.load %arg3[%c8, %c0_17] : memref<24x128xf32, #tpu.memory_space<vmem>>, vector<1x128xf32>
    tpu.vector_store %arg3[%c8, %c0_17], %53 {strides = array<i32>} : memref<24x128xf32, #tpu.memory_space<vmem>>, vector<1x128xf32>,
    %c9_i32 = arith.constant 9 : i32
    %55 = arith.addi %0, %c9_i32 : i32
    %56 = arith.index_cast %55 : i32 to index
    %57 = memref.load %arg1[%56] : memref<24xi32, #tpu.memory_space<smem>>
    %58 = arith.index_cast %57 : i32 to index
    %c0_18 = arith.constant 0 : index
    %59 = vector.load %arg2[%58, %c0_18] : memref<32x128xf32, #tpu.memory_space<vmem>>, vector<1x128xf32>
    %c9 = arith.constant 9 : index
    %c0_19 = arith.constant 0 : index
    %60 = vector.load %arg3[%c9, %c0_19] : memref<24x128xf32, #tpu.memory_space<vmem>>, vector<1x128xf32>
    tpu.vector_store %arg3[%c9, %c0_19], %59 {strides = array<i32>} : memref<24x128xf32, #tpu.memory_space<vmem>>, vector<1x128xf32>,
    %c10_i32 = arith.constant 10 : i32
    %61 = arith.addi %0, %c10_i32 : i32
    %62 = arith.index_cast %61 : i32 to index
    %63 = memref.load %arg1[%62] : memref<24xi32, #tpu.memory_space<smem>>
    %64 = arith.index_cast %63 : i32 to index
    %c0_20 = arith.constant 0 : index
    %65 = vector.load %arg2[%64, %c0_20] : memref<32x128xf32, #tpu.memory_space<vmem>>, vector<1x128xf32>
    %c10 = arith.constant 10 : index
    %c0_21 = arith.constant 0 : index
    %66 = vector.load %arg3[%c10, %c0_21] : memref<24x128xf32, #tpu.memory_space<vmem>>, vector<1x128xf32>
    tpu.vector_store %arg3[%c10, %c0_21], %65 {strides = array<i32>} : memref<24x128xf32, #tpu.memory_space<vmem>>, vector<1x128xf32>,
    %c11_i32 = arith.constant 11 : i32
    %67 = arith.addi %0, %c11_i32 : i32
    %68 = arith.index_cast %67 : i32 to index
    %69 = memref.load %arg1[%68] : memref<24xi32, #tpu.memory_space<smem>>
    %70 = arith.index_cast %69 : i32 to index
    %c0_22 = arith.constant 0 : index
    %71 = vector.load %arg2[%70, %c0_22] : memref<32x128xf32, #tpu.memory_space<vmem>>, vector<1x128xf32>
    %c11 = arith.constant 11 : index
    %c0_23 = arith.constant 0 : index
    %72 = vector.load %arg3[%c11, %c0_23] : memref<24x128xf32, #tpu.memory_space<vmem>>, vector<1x128xf32>
    tpu.vector_store %arg3[%c11, %c0_23], %71 {strides = array<i32>} : memref<24x128xf32, #tpu.memory_space<vmem>>, vector<1x128xf32>,
    %c12_i32 = arith.constant 12 : i32
    %73 = arith.addi %0, %c12_i32 : i32
    %74 = arith.index_cast %73 : i32 to index
    %75 = memref.load %arg1[%74] : memref<24xi32, #tpu.memory_space<smem>>
    %76 = arith.index_cast %75 : i32 to index
    %c0_24 = arith.constant 0 : index
    %77 = vector.load %arg2[%76, %c0_24] : memref<32x128xf32, #tpu.memory_space<vmem>>, vector<1x128xf32>
    %c12 = arith.constant 12 : index
    %c0_25 = arith.constant 0 : index
    %78 = vector.load %arg3[%c12, %c0_25] : memref<24x128xf32, #tpu.memory_space<vmem>>, vector<1x128xf32>
    tpu.vector_store %arg3[%c12, %c0_25], %77 {strides = array<i32>} : memref<24x128xf32, #tpu.memory_space<vmem>>, vector<1x128xf32>,
    %c13_i32 = arith.constant 13 : i32
    %79 = arith.addi %0, %c13_i32 : i32
    %80 = arith.index_cast %79 : i32 to index
    %81 = memref.load %arg1[%80] : memref<24xi32, #tpu.memory_space<smem>>
    %82 = arith.index_cast %81 : i32 to index
    %c0_26 = arith.constant 0 : index
    %83 = vector.load %arg2[%82, %c0_26] : memref<32x128xf32, #tpu.memory_space<vmem>>, vector<1x128xf32>
    %c13 = arith.constant 13 : index
    %c0_27 = arith.constant 0 : index
    %84 = vector.load %arg3[%c13, %c0_27] : memref<24x128xf32, #tpu.memory_space<vmem>>, vector<1x128xf32>
    tpu.vector_store %arg3[%c13, %c0_27], %83 {strides = array<i32>} : memref<24x128xf32, #tpu.memory_space<vmem>>, vector<1x128xf32>,
    %c14_i32 = arith.constant 14 : i32
    %85 = arith.addi %0, %c14_i32 : i32
    %86 = arith.index_cast %85 : i32 to index
    %87 = memref.load %arg1[%86] : memref<24xi32, #tpu.memory_space<smem>>
    %88 = arith.index_cast %87 : i32 to index
    %c0_28 = arith.constant 0 : index
    %89 = vector.load %arg2[%88, %c0_28] : memref<32x128xf32, #tpu.memory_space<vmem>>, vector<1x128xf32>
    %c14 = arith.constant 14 : index
    %c0_29 = arith.constant 0 : index
    %90 = vector.load %arg3[%c14, %c0_29] : memref<24x128xf32, #tpu.memory_space<vmem>>, vector<1x128xf32>
    tpu.vector_store %arg3[%c14, %c0_29], %89 {strides = array<i32>} : memref<24x128xf32, #tpu.memory_space<vmem>>, vector<1x128xf32>,
    %c15_i32 = arith.constant 15 : i32
    %91 = arith.addi %0, %c15_i32 : i32
    %92 = arith.index_cast %91 : i32 to index
    %93 = memref.load %arg1[%92] : memref<24xi32, #tpu.memory_space<smem>>
    %94 = arith.index_cast %93 : i32 to index
    %c0_30 = arith.constant 0 : index
    %95 = vector.load %arg2[%94, %c0_30] : memref<32x128xf32, #tpu.memory_space<vmem>>, vector<1x128xf32>
    %c15 = arith.constant 15 : index
    %c0_31 = arith.constant 0 : index
    %96 = vector.load %arg3[%c15, %c0_31] : memref<24x128xf32, #tpu.memory_space<vmem>>, vector<1x128xf32>
    tpu.vector_store %arg3[%c15, %c0_31], %95 {strides = array<i32>} : memref<24x128xf32, #tpu.memory_space<vmem>>, vector<1x128xf32>,
    %c16_i32 = arith.constant 16 : i32
    %97 = arith.addi %0, %c16_i32 : i32
    %98 = arith.index_cast %97 : i32 to index
    %99 = memref.load %arg1[%98] : memref<24xi32, #tpu.memory_space<smem>>
    %100 = arith.index_cast %99 : i32 to index
    %c0_32 = arith.constant 0 : index
    %101 = vector.load %arg2[%100, %c0_32] : memref<32x128xf32, #tpu.memory_space<vmem>>, vector<1x128xf32>
    %c16 = arith.constant 16 : index
    %c0_33 = arith.constant 0 : index
    %102 = vector.load %arg3[%c16, %c0_33] : memref<24x128xf32, #tpu.memory_space<vmem>>, vector<1x128xf32>
    tpu.vector_store %arg3[%c16, %c0_33], %101 {strides = array<i32>} : memref<24x128xf32, #tpu.memory_space<vmem>>, vector<1x128xf32>,
    %c17_i32 = arith.constant 17 : i32
    %103 = arith.addi %0, %c17_i32 : i32
    %104 = arith.index_cast %103 : i32 to index
    %105 = memref.load %arg1[%104] : memref<24xi32, #tpu.memory_space<smem>>
    %106 = arith.index_cast %105 : i32 to index
    %c0_34 = arith.constant 0 : index
    %107 = vector.load %arg2[%106, %c0_34] : memref<32x128xf32, #tpu.memory_space<vmem>>, vector<1x128xf32>
    %c17 = arith.constant 17 : index
    %c0_35 = arith.constant 0 : index
    %108 = vector.load %arg3[%c17, %c0_35] : memref<24x128xf32, #tpu.memory_space<vmem>>, vector<1x128xf32>
    tpu.vector_store %arg3[%c17, %c0_35], %107 {strides = array<i32>} : memref<24x128xf32, #tpu.memory_space<vmem>>, vector<1x128xf32>,
    %c18_i32 = arith.constant 18 : i32
    %109 = arith.addi %0, %c18_i32 : i32
    %110 = arith.index_cast %109 : i32 to index
    %111 = memref.load %arg1[%110] : memref<24xi32, #tpu.memory_space<smem>>
    %112 = arith.index_cast %111 : i32 to index
    %c0_36 = arith.constant 0 : index
    %113 = vector.load %arg2[%112, %c0_36] : memref<32x128xf32, #tpu.memory_space<vmem>>, vector<1x128xf32>
    %c18 = arith.constant 18 : index
    %c0_37 = arith.constant 0 : index
    %114 = vector.load %arg3[%c18, %c0_37] : memref<24x128xf32, #tpu.memory_space<vmem>>, vector<1x128xf32>
    tpu.vector_store %arg3[%c18, %c0_37], %113 {strides = array<i32>} : memref<24x128xf32, #tpu.memory_space<vmem>>, vector<1x128xf32>,
    %c19_i32 = arith.constant 19 : i32
    %115 = arith.addi %0, %c19_i32 : i32
    %116 = arith.index_cast %115 : i32 to index
    %117 = memref.load %arg1[%116] : memref<24xi32, #tpu.memory_space<smem>>
    %118 = arith.index_cast %117 : i32 to index
    %c0_38 = arith.constant 0 : index
    %119 = vector.load %arg2[%118, %c0_38] : memref<32x128xf32, #tpu.memory_space<vmem>>, vector<1x128xf32>
    %c19 = arith.constant 19 : index
    %c0_39 = arith.constant 0 : index
    %120 = vector.load %arg3[%c19, %c0_39] : memref<24x128xf32, #tpu.memory_space<vmem>>, vector<1x128xf32>
    tpu.vector_store %arg3[%c19, %c0_39], %119 {strides = array<i32>} : memref<24x128xf32, #tpu.memory_space<vmem>>, vector<1x128xf32>,
    %c20_i32 = arith.constant 20 : i32
    %121 = arith.addi %0, %c20_i32 : i32
    %122 = arith.index_cast %121 : i32 to index
    %123 = memref.load %arg1[%122] : memref<24xi32, #tpu.memory_space<smem>>
    %124 = arith.index_cast %123 : i32 to index
    %c0_40 = arith.constant 0 : index
    %125 = vector.load %arg2[%124, %c0_40] : memref<32x128xf32, #tpu.memory_space<vmem>>, vector<1x128xf32>
    %c20 = arith.constant 20 : index
    %c0_41 = arith.constant 0 : index
    %126 = vector.load %arg3[%c20, %c0_41] : memref<24x128xf32, #tpu.memory_space<vmem>>, vector<1x128xf32>
    tpu.vector_store %arg3[%c20, %c0_41], %125 {strides = array<i32>} : memref<24x128xf32, #tpu.memory_space<vmem>>, vector<1x128xf32>,
    %c21_i32 = arith.constant 21 : i32
    %127 = arith.addi %0, %c21_i32 : i32
    %128 = arith.index_cast %127 : i32 to index
    %129 = memref.load %arg1[%128] : memref<24xi32, #tpu.memory_space<smem>>
    %130 = arith.index_cast %129 : i32 to index
    %c0_42 = arith.constant 0 : index
    %131 = vector.load %arg2[%130, %c0_42] : memref<32x128xf32, #tpu.memory_space<vmem>>, vector<1x128xf32>
    %c21 = arith.constant 21 : index
    %c0_43 = arith.constant 0 : index
    %132 = vector.load %arg3[%c21, %c0_43] : memref<24x128xf32, #tpu.memory_space<vmem>>, vector<1x128xf32>
    tpu.vector_store %arg3[%c21, %c0_43], %131 {strides = array<i32>} : memref<24x128xf32, #tpu.memory_space<vmem>>, vector<1x128xf32>,
    %c22_i32 = arith.constant 22 : i32
    %133 = arith.addi %0, %c22_i32 : i32
    %134 = arith.index_cast %133 : i32 to index
    %135 = memref.load %arg1[%134] : memref<24xi32, #tpu.memory_space<smem>>
    %136 = arith.index_cast %135 : i32 to index
    %c0_44 = arith.constant 0 : index
    %137 = vector.load %arg2[%136, %c0_44] : memref<32x128xf32, #tpu.memory_space<vmem>>, vector<1x128xf32>
    %c22 = arith.constant 22 : index
    %c0_45 = arith.constant 0 : index
    %138 = vector.load %arg3[%c22, %c0_45] : memref<24x128xf32, #tpu.memory_space<vmem>>, vector<1x128xf32>
    tpu.vector_store %arg3[%c22, %c0_45], %137 {strides = array<i32>} : memref<24x128xf32, #tpu.memory_space<vmem>>, vector<1x128xf32>,
    %c23_i32 = arith.constant 23 : i32
    %139 = arith.addi %0, %c23_i32 : i32
    %140 = arith.index_cast %139 : i32 to index
    %141 = memref.load %arg1[%140] : memref<24xi32, #tpu.memory_space<smem>>
    %142 = arith.index_cast %141 : i32 to index
    %c0_46 = arith.constant 0 : index
    %143 = vector.load %arg2[%142, %c0_46] : memref<32x128xf32, #tpu.memory_space<vmem>>, vector<1x128xf32>
    %c23 = arith.constant 23 : index
    %c0_47 = arith.constant 0 : index
    %144 = vector.load %arg3[%c23, %c0_47] : memref<24x128xf32, #tpu.memory_space<vmem>>, vector<1x128xf32>
    tpu.vector_store %arg3[%c23, %c0_47], %143 {strides = array<i32>} : memref<24x128xf32, #tpu.memory_space<vmem>>, vector<1x128xf32>,
    return
  }
  func.func @transform_0(%arg0: i32, %arg1: memref<24xi32, #tpu.memory_space<smem>>) -> (i32, i32) {
    %c0_i32 = arith.constant 0 : i32
    %c0_i32_0 = arith.constant 0 : i32
    %c0_i32_1 = arith.constant 0 : i32
    return %c0_i32, %c0_i32_0 : i32, i32
  }
  func.func @transform_1(%arg0: i32, %arg1: memref<24xi32, #tpu.memory_space<smem>>) -> (i32, i32) {
    %c0_i32 = arith.constant 0 : i32
    %c0_i32_0 = arith.constant 0 : i32
    return %arg0, %c0_i32 : i32, i32
  }
}

</mosaic_0001>

<llo_original>
// kernel: tpu_custom_call.1
$region0: #{tpu_custom_call.1}
  #allocation0 [shape = 'u32[]', space=smem, size = 0x4, offset = 0x4, fixed_abs, tag = 'smem constant byte address 0x4 - core index']
  #allocation1 [shape = 'u32[144,128]{1,0:T(1,128)}', space=vmem, size = 0x12000, scoped, tag = 'internal scratch']
  #allocation2 [shape = 's32[1]{0}', space=sflag, size = 0x4, scoped, tag = 'scoped memory for tpu_custom_call.1']
  #allocation3 [shape = 'u8[512]{0}', space=smem, size = 0x200, scoped, tag = 'prefetched SMEM operand 0']
  %s0 = inlined_call_operand.hbm [shape: s32[24], index: 0, kind: input, shape index: {}]
  %s1 = inlined_call_operand.hbm [shape: f32[32,128], index: 1, kind: input, shape index: {}]
  %s2 = inlined_call_operand.hbm [shape: f32[24,128], index: 2, kind: output, shape index: {}]
  %s3 = sld [smem:[#allocation0]]
  $region18: #{tpu_custom_call.1} parent=0
    _
  %s5 = ssub.s32 1, %s3
  %s6 = scalar_select 0, %s5, %s3
  %8 = dma.hbm_to_smem %s0, 16, [#allocation3], [#allocation2]
  %9 = dma.done [#allocation2], 16
  %10 = sfence
  $region1: #{tpu_custom_call.1} parent=0
    #allocation4 [shape = 'u8[16384]{0}', space=vmem, size = 0x4000, scoped, tag = 'input window, operand 1, single buffered']
    #allocation5 [shape = 's32[1]{0}', space=sflag, size = 0x4, scoped, tag = 'scoped memory for tpu_custom_call.1']
    #allocation6 [shape = 's32[1]{0}', space=sflag, size = 0x4, scoped, tag = 'scoped memory for tpu_custom_call.1']
    #allocation7 [shape = 'u8[12288]{0}', space=vmem, size = 0x3000, scoped, tag = 'output window, operand 0, single buffered']
    %11 = vsyncpa [#allocation5], 0
    %12 = vsyncpa [#allocation6], 0
    // Predicated region
    $region2: #{tpu_custom_call.1} parent=1 // pred_check
      _
    $region3: #{tpu_custom_call.1} parent=1 // pred_check_branch
      %14 = sbr.rel (0) target = $region5
    $region4: #{tpu_custom_call.1} parent=1 // pred_region
      %s16 = ssub.s32 512, 512
      %17 = vsyncadd [#allocation5], %s16
      %s18 = sshll.u32 [#allocation4], 4
      %s19 = int_to_ptr.vmem [resolvable:$true] %s18
      %24 = dma.hbm_to_vmem [thread:$0]  %s1, 512, %s19, [#allocation5], 128, 128, 8
    $region5: #{tpu_custom_call.1} parent=1 // pred_fallthru
      _
    // Predicated region
    $region6: #{tpu_custom_call.1} parent=1 // pred_check
      _
    $region7: #{tpu_custom_call.1} parent=1 // pred_check_branch
      %26 = sbr.rel (0) target = $region9
    $region8: #{tpu_custom_call.1} parent=1 // pred_region
      %27 = dma.done [#allocation5], 512
    $region9: #{tpu_custom_call.1} parent=1 // pred_fallthru
      _
    %s28 = smul.u32 0, 24
    %s29 = sld [smem:[#allocation3 + %s28]]
    %s30 = scalar_lea.vmem [#allocation4], %s29
    %v31 = vld [vmem:[%s30] sm:$0x1]
    %32 = vst [vmem:[#allocation7] sm:$0x1] %v31
    %s33 = sadd.s32 %s28, 1
    %s34 = sld [smem:[#allocation3 + %s33]]
    %s35 = scalar_lea.vmem [#allocation4], %s34
    %v36 = vld [vmem:[%s35] sm:$0x1]
    %37 = vst [vmem:[#allocation7 + $0x1] sm:$0x1] %v36
    %s38 = sadd.s32 %s28, 2
    %s39 = sld [smem:[#allocation3 + %s38]]
    %s40 = scalar_lea.vmem [#allocation4], %s39
    %v41 = vld [vmem:[%s40] sm:$0x1]
    %42 = vst [vmem:[#allocation7 + $0x2] sm:$0x1] %v41
    %s43 = sadd.s32 %s28, 3
    %s44 = sld [smem:[#allocation3 + %s43]]
    %s45 = scalar_lea.vmem [#allocation4], %s44
    %v46 = vld [vmem:[%s45] sm:$0x1]
    %47 = vst [vmem:[#allocation7 + $0x3] sm:$0x1] %v46
    %s48 = sadd.s32 %s28, 4
    %s49 = sld [smem:[#allocation3 + %s48]]
    %s50 = scalar_lea.vmem [#allocation4], %s49
    %v51 = vld [vmem:[%s50] sm:$0x1]
    %52 = vst [vmem:[#allocation7 + $0x4] sm:$0x1] %v51
    %s53 = sadd.s32 %s28, 5
    %s54 = sld [smem:[#allocation3 + %s53]]
    %s55 = scalar_lea.vmem [#allocation4], %s54
    %v56 = vld [vmem:[%s55] sm:$0x1]
    %57 = vst [vmem:[#allocation7 + $0x5] sm:$0x1] %v56
    %s58 = sadd.s32 %s28, 6
    %s59 = sld [smem:[#allocation3 + %s58]]
    %s60 = scalar_lea.vmem [#allocation4], %s59
    %v61 = vld [vmem:[%s60] sm:$0x1]
    %62 = vst [vmem:[#allocation7 + $0x6] sm:$0x1] %v61
    %s63 = sadd.s32 %s28, 7
    %s64 = sld [smem:[#allocation3 + %s63]]
    %s65 = scalar_lea.vmem [#allocation4], %s64
    %v66 = vld [vmem:[%s65] sm:$0x1]
    %67 = vst [vmem:[#allocation7 + $0x7] sm:$0x1] %v66
    %s68 = sadd.s32 %s28, 8
    %s69 = sld [smem:[#allocation3 + %s68]]
    %s70 = scalar_lea.vmem [#allocation4], %s69
    %v71 = vld [vmem:[%s70] sm:$0x1]
    %72 = vst [vmem:[#allocation7 + $0x8] sm:$0x1] %v71
    %s73 = sadd.s32 %s28, 9
    %s74 = sld [smem:[#allocation3 + %s73]]
    %s75 = scalar_lea.vmem [#allocation4], %s74
    %v76 = vld [vmem:[%s75] sm:$0x1]
    %77 = vst [vmem:[#allocation7 + $0x9] sm:$0x1] %v76
    %s78 = sadd.s32 %s28, 10
    %s79 = sld [smem:[#allocation3 + %s78]]
    %s80 = scalar_lea.vmem [#allocation4], %s79
    %v81 = vld [vmem:[%s80] sm:$0x1]
    %82 = vst [vmem:[#allocation7 + $0xa] sm:$0x1] %v81
    %s83 = sadd.s32 %s28, 11
    %s84 = sld [smem:[#allocation3 + %s83]]
    %s85 = scalar_lea.vmem [#allocation4], %s84
    %v86 = vld [vmem:[%s85] sm:$0x1]
    %87 = vst [vmem:[#allocation7 + $0xb] sm:$0x1] %v86
    %s88 = sadd.s32 %s28, 12
    %s89 = sld [smem:[#allocation3 + %s88]]
    %s90 = scalar_lea.vmem [#allocation4], %s89
    %v91 = vld [vmem:[%s90] sm:$0x1]
    %92 = vst [vmem:[#allocation7 + $0xc] sm:$0x1] %v91
    %s93 = sadd.s32 %s28, 13
    %s94 = sld [smem:[#allocation3 + %s93]]
    %s95 = scalar_lea.vmem [#allocation4], %s94
    %v96 = vld [vmem:[%s95] sm:$0x1]
    %97 = vst [vmem:[#allocation7 + $0xd] sm:$0x1] %v96
    %s98 = sadd.s32 %s28, 14
    %s99 = sld [smem:[#allocation3 + %s98]]
    %s100 = scalar_lea.vmem [#allocation4], %s99
    %v101 = vld [vmem:[%s100] sm:$0x1]
    %102 = vst [vmem:[#allocation7 + $0xe] sm:$0x1] %v101
    %s103 = sadd.s32 %s28, 15
    %s104 = sld [smem:[#allocation3 + %s103]]
    %s105 = scalar_lea.vmem [#allocation4], %s104
    %v106 = vld [vmem:[%s105] sm:$0x1]
    %107 = vst [vmem:[#allocation7 + $0xf] sm:$0x1] %v106
    %s108 = sadd.s32 %s28, 16
    %s109 = sld [smem:[#allocation3 + %s108]]
    %s110 = scalar_lea.vmem [#allocation4], %s109
    %v111 = vld [vmem:[%s110] sm:$0x1]
    %112 = vst [vmem:[#allocation7 + $0x10] sm:$0x1] %v111
    %s113 = sadd.s32 %s28, 17
    %s114 = sld [smem:[#allocation3 + %s113]]
    %s115 = scalar_lea.vmem [#allocation4], %s114
    %v116 = vld [vmem:[%s115] sm:$0x1]
    %117 = vst [vmem:[#allocation7 + $0x11] sm:$0x1] %v116
    %s118 = sadd.s32 %s28, 18
    %s119 = sld [smem:[#allocation3 + %s118]]
    %s120 = scalar_lea.vmem [#allocation4], %s119
    %v121 = vld [vmem:[%s120] sm:$0x1]
    %122 = vst [vmem:[#allocation7 + $0x12] sm:$0x1] %v121
    %s123 = sadd.s32 %s28, 19
    %s124 = sld [smem:[#allocation3 + %s123]]
    %s125 = scalar_lea.vmem [#allocation4], %s124
    %v126 = vld [vmem:[%s125] sm:$0x1]
    %127 = vst [vmem:[#allocation7 + $0x13] sm:$0x1] %v126
    %s128 = sadd.s32 %s28, 20
    %s129 = sld [smem:[#allocation3 + %s128]]
    %s130 = scalar_lea.vmem [#allocation4], %s129
    %v131 = vld [vmem:[%s130] sm:$0x1]
    %132 = vst [vmem:[#allocation7 + $0x14] sm:$0x1] %v131
    %s133 = sadd.s32 %s28, 21
    %s134 = sld [smem:[#allocation3 + %s133]]
    %s135 = scalar_lea.vmem [#allocation4], %s134
    %v136 = vld [vmem:[%s135] sm:$0x1]
    %137 = vst [vmem:[#allocation7 + $0x15] sm:$0x1] %v136
    %s138 = sadd.s32 %s28, 22
    %s139 = sld [smem:[#allocation3 + %s138]]
    %s140 = scalar_lea.vmem [#allocation4], %s139
    %v141 = vld [vmem:[%s140] sm:$0x1]
    %142 = vst [vmem:[#allocation7 + $0x16] sm:$0x1] %v141
    %s143 = sadd.s32 %s28, 23
    %s144 = sld [smem:[#allocation3 + %s143]]
    %s145 = scalar_lea.vmem [#allocation4], %s144
    %v146 = vld [vmem:[%s145] sm:$0x1]
    %147 = vst [vmem:[#allocation7 + $0x17] sm:$0x1] %v146
    // Predicated region
    $region10: #{tpu_custom_call.1} parent=1 // pred_check
      _
    $region11: #{tpu_custom_call.1} parent=1 // pred_check_branch
      %149 = sbr.rel (0) target = $region13
    $region12: #{tpu_custom_call.1} parent=1 // pred_region
      %s151 = ssub.s32 384, 384
      %152 = vsyncadd [#allocation6], %s151
      %s153 = sshll.u32 [#allocation7], 4
      %s154 = int_to_ptr.vmem [resolvable:$true] %s153
      %159 = dma.vmem_to_hbm [thread:$0]  %s154, 384, %s2, [#allocation6], 128, 128, 8
    $region13: #{tpu_custom_call.1} parent=1 // pred_fallthru
      _
    // Predicated region
    $region14: #{tpu_custom_call.1} parent=1 // pred_check
      _
    $region15: #{tpu_custom_call.1} parent=1 // pred_check_branch
      %161 = sbr.rel (0) target = $region17
    $region16: #{tpu_custom_call.1} parent=1 // pred_region
      %162 = dma.done [#allocation6], 384
    $region17: #{tpu_custom_call.1} parent=1 // pred_fallthru
      _
    %163 = vsyncpa [#allocation5], 1
    %164 = vsyncpa [#allocation6], 1

</llo_original>
